<compile_context>
chip_gen: v7x
topology: tpu7x:2x2x1
jax: 0.10.0
libtpu: 0.0.40
codegen_flags: <defaults>
</compile_context>

<pallas_src>
import functools

import jax
import jax.numpy as jnp
from jax.experimental import pallas as pl
from jax.experimental.pallas import tpu as pltpu


def _concat_pos_embed_kernel(n_hits, idx_ref, w_ref, out_ref):
    """idx_ref: (tile_rows, n_hits) int32, pre-offset fused lane positions;
    w_ref: (K_big, D_big) compute dtype; out_ref: (tile_rows, D_big)."""
    tile_rows = out_ref.shape[0]
    k_big = w_ref.shape[0]

    lane_iota = jax.lax.broadcasted_iota(jnp.int32, (tile_rows, k_big), 1)

    # One-hot with n_hits ones per row (hits live in disjoint lane blocks, so
    # OR-ing is exact).  Kept boolean until a single cast right before the dot.
    # NOTE: out-of-range indices (idx < 0 or >= max_node) yield an all-zero
    # block -> zero embedding for that table, unlike torch.nn.Embedding which
    # would raise; callers must pass in-range indices.
    onehot = None
    for j in range(n_hits):
        hit = lane_iota == idx_ref[:, j:j + 1]
        onehot = hit if onehot is None else (onehot | hit)
    onehot = onehot.astype(w_ref.dtype)

    # Single MXU matmul (f32 accumulate), single lane-dense full-width store.
    acc = jnp.dot(onehot, w_ref[...], preferred_element_type=jnp.float32)
    out_ref[...] = acc.astype(out_ref.dtype)


def concat_positional_embedding(positional_indices, weights, *,
                                compute_dtype=jnp.bfloat16, out_dtype=None,
                                tile_rows=None, onehot_bytes_cap=256 * 1024):
    """positional_indices: (N, P) int; weights: list of (max_node, w_i) f32.

    Returns (N, d_model) with d_model = sum(w_i), in `out_dtype` (defaults to
    `compute_dtype`).  compute_dtype=jnp.float32 reproduces the PyTorch f32
    gather; the default bf16 path rounds the weights once (explicit option per
    review).  Dropout with p=0 is the identity, so it is omitted.
    """
    n_seq, num_positions = positional_indices.shape
    assert len(weights) == num_positions
    max_node = int(weights[0].shape[0])
    assert all(int(w.shape[0]) == max_node for w in weights), \
        "all embedding tables must share the same row count (max_node)"
    widths = [int(w.shape[1]) for w in weights]
    d_model = sum(widths)
    if out_dtype is None:
        out_dtype = compute_dtype
    comp_itemsize = jnp.dtype(compute_dtype).itemsize
    out_itemsize = jnp.dtype(out_dtype).itemsize

    # --- Lane-dense fold: pack G consecutive sequence rows into the lane axis
    # so the output tile's last dim is a multiple of 128 (unmasked stores). ---
    if d_model % 128 == 0:
        group = 1
    elif 128 % d_model == 0:
        group = 128 // d_model
    else:
        group = 1   # tail lanes get masked stores; prefer d_model % 128 == 0.

    # --- Fuse tables into one block-diagonal weight (host/XLA side, once). ---
    # Dtype-aware row padding: packed bf16 sublane tile is (16, 128).
    row_align = 16 if comp_itemsize == 2 else 8
    max_node_pad = pl.cdiv(max_node, row_align) * row_align
    k_total = num_positions * max_node_pad
    k_big = group * k_total
    d_big = group * d_model

    fused = jnp.zeros((k_total, d_model), dtype=compute_dtype)
    col = 0
    for i, w in enumerate(weights):
        r0 = i * max_node_pad
        fused = fused.at[r0:r0 + max_node, col:col + widths[i]].set(
            w.astype(compute_dtype))
        col += widths[i]
    if group == 1:
        fused_big = fused
    else:
        fused_big = jnp.zeros((k_big, d_big), dtype=compute_dtype)
        for g in range(group):
            fused_big = fused_big.at[g * k_total:(g + 1) * k_total,
                                     g * d_model:(g + 1) * d_model].set(fused)

    # --- Host-side index prep: fold per-table and per-group lane offsets into
    # the indices so the kernel only does compare + or. ---
    rows = pl.cdiv(n_seq, group)          # folded sequence rows
    n_fold = rows * group
    idx = positional_indices.astype(jnp.int32)
    if n_fold != n_seq:
        idx = jnp.pad(idx, ((0, n_fold - n_seq), (0, 0)))
    offsets = (jnp.arange(group, dtype=jnp.int32)[:, None] * k_total
               + jnp.arange(num_positions, dtype=jnp.int32)[None, :]
               * max_node_pad)                               # (G, P)
    flat_idx = (idx.reshape(rows, group, num_positions)
                + offsets[None]).reshape(rows, group * num_positions)

    # --- Tile the (folded) sequence axis. ---
    if tile_rows is None:
        tile_rows = 512        # 512-1024 sweet spot on v7x; >=256 fine on v5e.
    # Cap the live one-hot (tile_rows x k_big) so it stays within vregs.
    max_rows_by_cap = max(
        8, (onehot_bytes_cap // max(k_big * comp_itemsize, 1)) // 8 * 8)
    tile_rows = min(tile_rows, max_rows_by_cap)
    tile_rows = min(tile_rows, pl.cdiv(rows, 8) * 8)
    tile_rows = max(8, tile_rows // 8 * 8)
    rows_pad = pl.cdiv(rows, tile_rows) * tile_rows
    if rows_pad != rows:
        flat_idx = jnp.pad(flat_idx, ((0, rows_pad - rows), (0, 0)))

    # --- VMEM budget: actual dtypes / buffer counts + 2 MiB headroom. ---
    weight_bytes = k_big * d_big * comp_itemsize
    single_buffer_weight = weight_bytes > (2 << 20)  # only worth it when big
    w_bufs = 1 if single_buffer_weight else 2
    vmem_need = (w_bufs * weight_bytes                         # resident weight
                 + 2 * tile_rows * group * num_positions * 4   # idx dbl-buffer
                 + 2 * tile_rows * d_big * out_itemsize        # out dbl-buffer
                 + tile_rows * k_big * comp_itemsize           # one-hot temp
                 + tile_rows * d_big * 4)                      # f32 accumulator
    vmem_limit = int(min(max(vmem_need + (2 << 20), 1 << 20), 48 << 20))
    # TODO(synk): for very large tables (max_node >~ 1k) the one-hot matmul is
    # the wrong strategy; switch to a scalar-prefetch DMA row gather
    # (PrefetchScalarGridSpec + pl.Element index_map) to stay mem-bound at the
    # true byte count.

    w_spec_kwargs = {}
    if single_buffer_weight:
        # Invariant operand: single-buffer to free VMEM (matters on v7x 64 MiB).
        w_spec_kwargs["pipeline_mode"] = pl.Buffered(1)

    kernel = functools.partial(_concat_pos_embed_kernel,
                               group * num_positions)

    out = pl.pallas_call(
        kernel,
        out_shape=jax.ShapeDtypeStruct((rows_pad, d_big), out_dtype),
        grid=(rows_pad // tile_rows,),
        in_specs=[
            pl.BlockSpec((tile_rows, group * num_positions), lambda i: (i, 0)),
            # Fused weight: constant index map -> stays VMEM-resident.
            pl.BlockSpec((k_big, d_big), lambda i: (0, 0), **w_spec_kwargs),
        ],
        # If profiling showed exposed writeback, out/idx could use Buffered(3).
        out_specs=pl.BlockSpec((tile_rows, d_big), lambda i: (i, 0)),
        compiler_params=pltpu.CompilerParams(
            dimension_semantics=("parallel",),
            vmem_limit_bytes=vmem_limit),
    )(flat_idx, fused_big)

    # Unfold the lane packing back to (N, d_model) and drop padding.
    return out.reshape(rows_pad * group, d_model)[:n_seq]


def _reference(positional_indices, weights):
    # Plain-JAX equivalent of the PyTorch forward (dropout p=0 -> identity).
    outs = [jnp.take(w, positional_indices[:, i], axis=0)
            for i, w in enumerate(weights)]
    return jnp.concatenate(outs, axis=1)


if __name__ == "__main__":
    # Module hyperparameters (small, consistent with the forward pass).
    d_model = 32
    num_positions = 3
    max_node = 15
    n_seq = 8

    unit_d = d_model // num_positions          # 10
    rem = d_model % num_positions              # 2
    widths = [unit_d + rem if i == num_positions - 1 else unit_d
              for i in range(num_positions)]   # [10, 10, 12]

    key = jax.random.PRNGKey(0)
    wkeys = jax.random.split(key, num_positions + 1)

    # nn.Embedding default init: N(0, 1).
    weights = [jax.random.normal(wkeys[i], (max_node, widths[i]),
                                 dtype=jnp.float32)
               for i in range(num_positions)]

    # positional_indices: one index vector per position, packed as (N, P).
    positional_indices = jax.random.randint(
        wkeys[-1], (n_seq, num_positions), 0, max_node, dtype=jnp.int32)

    # TODO(synk): dropout with p > 0 (training mode) would need
    # pltpu.prng_random_bits-based masking; p defaults to 0 so it is identity.

    # Fast path (default): bf16 compute + bf16 output (weights rounded once).
    out_bf16 = concat_positional_embedding(positional_indices, weights,
                                           compute_dtype=jnp.bfloat16)
    out_bf16 = jax.block_until_ready(out_bf16)
    assert out_bf16.shape == (n_seq, d_model)
    assert out_bf16.dtype == jnp.bfloat16

    # Exact check: one-hot @ bf16 weight reproduces the bf16-rounded rows.
    ref_bf16 = _reference(positional_indices,
                          [w.astype(jnp.bfloat16).astype(jnp.float32)
                           for w in weights])
    assert jnp.allclose(out_bf16.astype(jnp.float32), ref_bf16, atol=1e-6), \
        "bf16 path mismatch vs bf16-rounded gather"

    # Loose check vs the f32 PyTorch-semantics reference (bf16 rounding only).
    ref_f32 = _reference(positional_indices, weights)
    assert jnp.allclose(out_bf16.astype(jnp.float32), ref_f32,
                        atol=5e-2, rtol=1e-2), \
        "bf16 path too far from f32 reference"

    # Explicit high-precision path: f32 compute + f32 output.
    out_f32 = concat_positional_embedding(positional_indices, weights,
                                          compute_dtype=jnp.float32)
    out_f32 = jax.block_until_ready(out_f32)
    assert out_f32.shape == (n_seq, d_model)
    assert out_f32.dtype == jnp.float32
    assert jnp.allclose(out_f32, ref_f32, atol=2e-2, rtol=1e-2), \
        "f32 path mismatch vs f32 reference"

    print("KERNEL_OK")
</pallas_src>

<mosaic_0001>
module attributes {stable_mosaic.version = 11 : i64} {
  func.func @_concat_pos_embed_kernel(%arg0: i32, %arg1: memref<8x12xi32, #tpu.memory_space<vmem>>, %arg2: memref<192x128xbf16, #tpu.memory_space<vmem>>, %arg3: memref<8x128xbf16, #tpu.memory_space<vmem>>) attributes {dimension_semantics = [#tpu.dimension_semantics<parallel>], iteration_bounds = array<i64: 1>, scalar_prefetch = 0 : i64, scratch_operands = 0 : i64, tpu.core_type = #tpu.core_type<tc>, window_params = [{transform_indices = @transform_0, window_bounds = array<i64: 8, 12>}, {pipeline_mode = #tpu.pipeline_mode<synchronous>, transform_indices = @transform_1, window_bounds = array<i64: 192, 128>}, {transform_indices = @transform_2, window_bounds = array<i64: 8, 128>}]} {
    %0 = tpu.iota {dimensions = array<i32: 1>} : vector<8x192xi32>
    %c0 = arith.constant 0 : index
    %c0_0 = arith.constant 0 : index
    %1 = vector.load %arg1[%c0, %c0_0] : memref<8x12xi32, #tpu.memory_space<vmem>>, vector<8x1xi32>
    %2 = vector.broadcast %1 : vector<8x1xi32> to vector<8x192xi32>
    %3 = arith.cmpi eq, %0, %2 : vector<8x192xi32>
    %c0_1 = arith.constant 0 : index
    %c1 = arith.constant 1 : index
    %4 = vector.load %arg1[%c0_1, %c1] : memref<8x12xi32, #tpu.memory_space<vmem>>, vector<8x1xi32>
    %5 = vector.broadcast %4 : vector<8x1xi32> to vector<8x192xi32>
    %6 = arith.cmpi eq, %0, %5 : vector<8x192xi32>
    %7 = arith.ori %3, %6 : vector<8x192xi1>
    %c0_2 = arith.constant 0 : index
    %c2 = arith.constant 2 : index
    %8 = vector.load %arg1[%c0_2, %c2] : memref<8x12xi32, #tpu.memory_space<vmem>>, vector<8x1xi32>
    %9 = vector.broadcast %8 : vector<8x1xi32> to vector<8x192xi32>
    %10 = arith.cmpi eq, %0, %9 : vector<8x192xi32>
    %11 = arith.ori %7, %10 : vector<8x192xi1>
    %c0_3 = arith.constant 0 : index
    %c3 = arith.constant 3 : index
    %12 = vector.load %arg1[%c0_3, %c3] : memref<8x12xi32, #tpu.memory_space<vmem>>, vector<8x1xi32>
    %13 = vector.broadcast %12 : vector<8x1xi32> to vector<8x192xi32>
    %14 = arith.cmpi eq, %0, %13 : vector<8x192xi32>
    %15 = arith.ori %11, %14 : vector<8x192xi1>
    %c0_4 = arith.constant 0 : index
    %c4 = arith.constant 4 : index
    %16 = vector.load %arg1[%c0_4, %c4] : memref<8x12xi32, #tpu.memory_space<vmem>>, vector<8x1xi32>
    %17 = vector.broadcast %16 : vector<8x1xi32> to vector<8x192xi32>
    %18 = arith.cmpi eq, %0, %17 : vector<8x192xi32>
    %19 = arith.ori %15, %18 : vector<8x192xi1>
    %c0_5 = arith.constant 0 : index
    %c5 = arith.constant 5 : index
    %20 = vector.load %arg1[%c0_5, %c5] : memref<8x12xi32, #tpu.memory_space<vmem>>, vector<8x1xi32>
    %21 = vector.broadcast %20 : vector<8x1xi32> to vector<8x192xi32>
    %22 = arith.cmpi eq, %0, %21 : vector<8x192xi32>
    %23 = arith.ori %19, %22 : vector<8x192xi1>
    %c0_6 = arith.constant 0 : index
    %c6 = arith.constant 6 : index
    %24 = vector.load %arg1[%c0_6, %c6] : memref<8x12xi32, #tpu.memory_space<vmem>>, vector<8x1xi32>
    %25 = vector.broadcast %24 : vector<8x1xi32> to vector<8x192xi32>
    %26 = arith.cmpi eq, %0, %25 : vector<8x192xi32>
    %27 = arith.ori %23, %26 : vector<8x192xi1>
    %c0_7 = arith.constant 0 : index
    %c7 = arith.constant 7 : index
    %28 = vector.load %arg1[%c0_7, %c7] : memref<8x12xi32, #tpu.memory_space<vmem>>, vector<8x1xi32>
    %29 = vector.broadcast %28 : vector<8x1xi32> to vector<8x192xi32>
    %30 = arith.cmpi eq, %0, %29 : vector<8x192xi32>
    %31 = arith.ori %27, %30 : vector<8x192xi1>
    %c0_8 = arith.constant 0 : index
    %c8 = arith.constant 8 : index
    %32 = vector.load %arg1[%c0_8, %c8] : memref<8x12xi32, #tpu.memory_space<vmem>>, vector<8x1xi32>
    %33 = vector.broadcast %32 : vector<8x1xi32> to vector<8x192xi32>
    %34 = arith.cmpi eq, %0, %33 : vector<8x192xi32>
    %35 = arith.ori %31, %34 : vector<8x192xi1>
    %c0_9 = arith.constant 0 : index
    %c9 = arith.constant 9 : index
    %36 = vector.load %arg1[%c0_9, %c9] : memref<8x12xi32, #tpu.memory_space<vmem>>, vector<8x1xi32>
    %37 = vector.broadcast %36 : vector<8x1xi32> to vector<8x192xi32>
    %38 = arith.cmpi eq, %0, %37 : vector<8x192xi32>
    %39 = arith.ori %35, %38 : vector<8x192xi1>
    %c0_10 = arith.constant 0 : index
    %c10 = arith.constant 10 : index
    %40 = vector.load %arg1[%c0_10, %c10] : memref<8x12xi32, #tpu.memory_space<vmem>>, vector<8x1xi32>
    %41 = vector.broadcast %40 : vector<8x1xi32> to vector<8x192xi32>
    %42 = arith.cmpi eq, %0, %41 : vector<8x192xi32>
    %43 = arith.ori %39, %42 : vector<8x192xi1>
    %c0_11 = arith.constant 0 : index
    %c11 = arith.constant 11 : index
    %44 = vector.load %arg1[%c0_11, %c11] : memref<8x12xi32, #tpu.memory_space<vmem>>, vector<8x1xi32>
    %45 = vector.broadcast %44 : vector<8x1xi32> to vector<8x192xi32>
    %46 = arith.cmpi eq, %0, %45 : vector<8x192xi32>
    %47 = arith.ori %43, %46 : vector<8x192xi1>
    %48 = arith.extui %47 : vector<8x192xi1> to vector<8x192xi32>
    %49 = arith.sitofp %48 : vector<8x192xi32> to vector<8x192xf32>
    %50 = arith.truncf %49 : vector<8x192xf32> to vector<8x192xbf16>
    %c0_12 = arith.constant 0 : index
    %c0_13 = arith.constant 0 : index
    %51 = vector.load %arg2[%c0_12, %c0_13] : memref<192x128xbf16, #tpu.memory_space<vmem>>, vector<192x128xbf16>
    %cst = arith.constant dense<0.000000e+00> : vector<8x128xf32>
    %52 = tpu.matmul %50, %51, %cst {dimension_numbers = #tpu.dot_dimension_numbers<[1], [0], [0], [1], [0, 0, 1, 1], [], []>} : vector<8x192xbf16>, vector<192x128xbf16>, vector<8x128xf32> -> vector<8x128xf32>
    %53 = arith.truncf %52 : vector<8x128xf32> to vector<8x128xbf16>
    %c0_14 = arith.constant 0 : index
    %c0_15 = arith.constant 0 : index
    %54 = vector.load %arg3[%c0_14, %c0_15] : memref<8x128xbf16, #tpu.memory_space<vmem>>, vector<8x128xbf16>
    tpu.vector_store %arg3[%c0_14, %c0_15], %53 {strides = array<i32>} : memref<8x128xbf16, #tpu.memory_space<vmem>>, vector<8x128xbf16>,
    return
  }
  func.func @transform_0(%arg0: i32) -> (i32, i32) {
    %c0_i32 = arith.constant 0 : i32
    %c0_i32_0 = arith.constant 0 : i32
    return %arg0, %c0_i32 : i32, i32
  }
  func.func @transform_1(%arg0: i32) -> (i32, i32) {
    %c0_i32 = arith.constant 0 : i32
    %c0_i32_0 = arith.constant 0 : i32
    %c0_i32_1 = arith.constant 0 : i32
    return %c0_i32, %c0_i32_0 : i32, i32
  }
  func.func @transform_2(%arg0: i32) -> (i32, i32) {
    %c0_i32 = arith.constant 0 : i32
    %c0_i32_0 = arith.constant 0 : i32
    return %arg0, %c0_i32 : i32, i32
  }
}

</mosaic_0001>

<llo_original>
// kernel: tpu_custom_call.1
$region0: #{tpu_custom_call.1}
  #allocation0 [shape = 'u32[]', space=smem, size = 0x4, offset = 0x4, fixed_abs, tag = 'smem constant byte address 0x4 - core index']
  #allocation1 [shape = 'u32[144,128]{1,0:T(1,128)}', space=vmem, size = 0x12000, scoped, tag = 'internal scratch']
  %s0 = inlined_call_operand.hbm [shape: s32[8,12], index: 0, kind: input, shape index: {}]
  %s1 = inlined_call_operand.hbm [shape: bf16[192,128], index: 1, kind: input, shape index: {}]
  %s2 = inlined_call_operand.hbm [shape: bf16[8,128], index: 2, kind: output, shape index: {}]
  %s3 = sld [smem:[#allocation0]]
  $region26: #{tpu_custom_call.1} parent=0
    _
  %s5 = ssub.s32 1, %s3
  %s6 = scalar_select 0, %s5, %s3
  $region1: #{tpu_custom_call.1} parent=0
    #allocation2 [shape = 'u8[4096]{0}', space=vmem, size = 0x1000, scoped, tag = 'input window, operand 0, single buffered']
    #allocation3 [shape = 's32[1]{0}', space=sflag, size = 0x4, scoped, tag = 'scoped memory for tpu_custom_call.1']
    #allocation4 [shape = 's32[1]{0}', space=sflag, size = 0x4, scoped, tag = 'scoped memory for tpu_custom_call.1']
    #allocation5 [shape = 'u8[49152]{0}', space=vmem, size = 0xc000, scoped, tag = 'input window, operand 1, single buffered']
    #allocation6 [shape = 's32[1]{0}', space=sflag, size = 0x4, scoped, tag = 'scoped memory for tpu_custom_call.1']
    #allocation7 [shape = 'u8[2048]{0}', space=vmem, size = 0x800, scoped, tag = 'output window, operand 0, single buffered']
    %7 = vsyncpa [#allocation3], 0
    %8 = vsyncpa [#allocation6], 0
    %9 = vsyncpa [#allocation4], 0
    // Predicated region
    $region2: #{tpu_custom_call.1} parent=1 // pred_check
      _
    $region3: #{tpu_custom_call.1} parent=1 // pred_check_branch
      %11 = sbr.rel (0) target = $region5
    $region4: #{tpu_custom_call.1} parent=1 // pred_region
      %s13 = ssub.s32 128, 128
      %14 = vsyncadd [#allocation3], %s13
      %s16 = sshll.u32 [#allocation2], 4
      %s17 = int_to_ptr.vmem [resolvable:$true] %s16
      %19 = dma.hbm_to_vmem [thread:$0]  %s0, 128, %s17, [#allocation3]
    $region5: #{tpu_custom_call.1} parent=1 // pred_fallthru
      _
    // Predicated region
    $region6: #{tpu_custom_call.1} parent=1 // pred_check
      _
    $region7: #{tpu_custom_call.1} parent=1 // pred_check_branch
      %21 = sbr.rel (0) target = $region9
    $region8: #{tpu_custom_call.1} parent=1 // pred_region
      %s23 = ssub.s32 1536, 1536
      %24 = vsyncadd [#allocation6], %s23
      %s25 = sshll.u32 [#allocation5], 4
      %s26 = int_to_ptr.vmem [resolvable:$true] %s25
      %31 = dma.hbm_to_vmem [thread:$0]  %s1, 1536, %s26, [#allocation6], 64, 64, 4
    $region9: #{tpu_custom_call.1} parent=1 // pred_fallthru
      _
    // Predicated region
    $region10: #{tpu_custom_call.1} parent=1 // pred_check
      _
    $region11: #{tpu_custom_call.1} parent=1 // pred_check_branch
      %33 = sbr.rel (0) target = $region13
    $region12: #{tpu_custom_call.1} parent=1 // pred_region
      %34 = dma.done [#allocation3], 128
    $region13: #{tpu_custom_call.1} parent=1 // pred_fallthru
      _
    // Predicated region
    $region14: #{tpu_custom_call.1} parent=1 // pred_check
      _
    $region15: #{tpu_custom_call.1} parent=1 // pred_check_branch
      %36 = sbr.rel (0) target = $region17
    $region16: #{tpu_custom_call.1} parent=1 // pred_region
      %37 = dma.done [#allocation6], 1536
    $region17: #{tpu_custom_call.1} parent=1 // pred_fallthru
      _
    %v39 = vlaneseq
    %v40 = vand.u32 %v39, 127
    %v41 = vadd.s32 %v40, 128
    %v42 = vld [vmem:[#allocation2] sm:$0xff]
    %43 = vset.pattern.permute.xlu0 0
    %44 = vperm.xlu0 %43, %v42
    %v45 = vpop.permute.xlu0 %44
    %vm46 = vcmp.eq.s32.totalorder %v40, %v45
    %vm47 = vcmp.eq.s32.totalorder %v41, %v45
    %48 = vset.pattern.permute.xlu0 1
    %49 = vperm.xlu0 %48, %v42
    %v50 = vpop.permute.xlu0 %49
    %vm51 = vcmp.eq.s32.totalorder %v40, %v50
    %vm52 = vcmp.eq.s32.totalorder %v41, %v50
    %vm53 = vmor %vm46, %vm51
    %vm54 = vmor %vm47, %vm52
    %55 = vset.pattern.permute.xlu0 2
    %56 = vperm.xlu0 %55, %v42
    %v57 = vpop.permute.xlu0 %56
    %vm58 = vcmp.eq.s32.totalorder %v40, %v57
    %vm59 = vcmp.eq.s32.totalorder %v41, %v57
    %vm60 = vmor %vm53, %vm58
    %vm61 = vmor %vm54, %vm59
    %62 = vset.pattern.permute.xlu0 3
    %63 = vperm.xlu0 %62, %v42
    %v64 = vpop.permute.xlu0 %63
    %vm65 = vcmp.eq.s32.totalorder %v40, %v64
    %vm66 = vcmp.eq.s32.totalorder %v41, %v64
    %vm67 = vmor %vm60, %vm65
    %vm68 = vmor %vm61, %vm66
    %69 = vset.pattern.permute.xlu0 4
    %70 = vperm.xlu0 %69, %v42
    %v71 = vpop.permute.xlu0 %70
    %vm72 = vcmp.eq.s32.totalorder %v40, %v71
    %vm73 = vcmp.eq.s32.totalorder %v41, %v71
    %vm74 = vmor %vm67, %vm72
    %vm75 = vmor %vm68, %vm73
    %76 = vset.pattern.permute.xlu0 5
    %77 = vperm.xlu0 %76, %v42
    %v78 = vpop.permute.xlu0 %77
    %vm79 = vcmp.eq.s32.totalorder %v40, %v78
    %vm80 = vcmp.eq.s32.totalorder %v41, %v78
    %vm81 = vmor %vm74, %vm79
    %vm82 = vmor %vm75, %vm80
    %83 = vset.pattern.permute.xlu0 6
    %84 = vperm.xlu0 %83, %v42
    %v85 = vpop.permute.xlu0 %84
    %vm86 = vcmp.eq.s32.totalorder %v40, %v85
    %vm87 = vcmp.eq.s32.totalorder %v41, %v85
    %vm88 = vmor %vm81, %vm86
    %vm89 = vmor %vm82, %vm87
    %90 = vset.pattern.permute.xlu0 7
    %91 = vperm.xlu0 %90, %v42
    %v92 = vpop.permute.xlu0 %91
    %vm93 = vcmp.eq.s32.totalorder %v40, %v92
    %vm94 = vcmp.eq.s32.totalorder %v41, %v92
    %vm95 = vmor %vm88, %vm93
    %vm96 = vmor %vm89, %vm94
    %97 = vset.pattern.permute.xlu0 8
    %98 = vperm.xlu0 %97, %v42
    %v99 = vpop.permute.xlu0 %98
    %vm100 = vcmp.eq.s32.totalorder %v40, %v99
    %vm101 = vcmp.eq.s32.totalorder %v41, %v99
    %vm102 = vmor %vm95, %vm100
    %vm103 = vmor %vm96, %vm101
    %104 = vset.pattern.permute.xlu0 9
    %105 = vperm.xlu0 %104, %v42
    %v106 = vpop.permute.xlu0 %105
    %vm107 = vcmp.eq.s32.totalorder %v40, %v106
    %vm108 = vcmp.eq.s32.totalorder %v41, %v106
    %vm109 = vmor %vm102, %vm107
    %vm110 = vmor %vm103, %vm108
    %111 = vset.pattern.permute.xlu0 10
    %112 = vperm.xlu0 %111, %v42
    %v113 = vpop.permute.xlu0 %112
    %vm114 = vcmp.eq.s32.totalorder %v40, %v113
    %vm115 = vcmp.eq.s32.totalorder %v41, %v113
    %vm116 = vmor %vm109, %vm114
    %vm117 = vmor %vm110, %vm115
    %118 = vset.pattern.permute.xlu0 11
    %119 = vperm.xlu0 %118, %v42
    %v120 = vpop.permute.xlu0 %119
    %vm121 = vcmp.eq.s32.totalorder %v40, %v120
    %vm122 = vcmp.eq.s32.totalorder %v41, %v120
    %vm123 = vmor %vm116, %vm121
    %vm124 = vmor %vm117, %vm122
    %v125 = vsel %vm123, 1, 0
    %v126 = vsel %vm124, 1, 0
    %v127 = vcvt.s32.f32 %v125
    %v128 = vcvt.s32.f32 %v126
    %v129 = vpack.c.bf16 %v127, %v127
    %v130 = vpack.c.bf16 %v128, %v128
    %v131 = vld [vmem:[#allocation5] sm:$0xf]
    %v132 = vld [vmem:[#allocation5 + $0x4] sm:$0xf]
    %v133 = vld [vmem:[#allocation5 + $0x8] sm:$0xf]
    %v134 = vld [vmem:[#allocation5 + $0xc] sm:$0xf]
    %v135 = vld [vmem:[#allocation5 + $0x10] sm:$0xf]
    %v136 = vld [vmem:[#allocation5 + $0x14] sm:$0xf]
    %v137 = vld [vmem:[#allocation5 + $0x18] sm:$0xf]
    %v138 = vld [vmem:[#allocation5 + $0x1c] sm:$0xf]
    %v139 = vld [vmem:[#allocation5 + $0x20] sm:$0xf]
    %v140 = vld [vmem:[#allocation5 + $0x24] sm:$0xf]
    %v141 = vld [vmem:[#allocation5 + $0x28] sm:$0xf]
    %v142 = vld [vmem:[#allocation5 + $0x2c] sm:$0xf]
    %v143 = vld [vmem:[#allocation5 + $0x30] sm:$0xf]
    %v144 = vld [vmem:[#allocation5 + $0x34] sm:$0xf]
    %v145 = vld [vmem:[#allocation5 + $0x38] sm:$0xf]
    %v146 = vld [vmem:[#allocation5 + $0x3c] sm:$0xf]
    %v147 = vld [vmem:[#allocation5 + $0x40] sm:$0xf]
    %v148 = vld [vmem:[#allocation5 + $0x44] sm:$0xf]
    %v149 = vld [vmem:[#allocation5 + $0x48] sm:$0xf]
    %v150 = vld [vmem:[#allocation5 + $0x4c] sm:$0xf]
    %v151 = vld [vmem:[#allocation5 + $0x50] sm:$0xf]
    %v152 = vld [vmem:[#allocation5 + $0x54] sm:$0xf]
    %v153 = vld [vmem:[#allocation5 + $0x58] sm:$0xf]
    %v154 = vld [vmem:[#allocation5 + $0x5c] sm:$0xf]
    %v179 = vunpack.c.l.b16 %v131
    %v180 = vunpack.c.l.b16 %v132
    %v181 = vunpack.c.l.b16 %v133
    %v182 = vunpack.c.l.b16 %v134
    %v183 = vunpack.c.l.b16 %v135
    %v184 = vunpack.c.l.b16 %v136
    %v185 = vunpack.c.l.b16 %v137
    %v186 = vunpack.c.l.b16 %v138
    %v187 = vunpack.c.l.b16 %v139
    %v188 = vunpack.c.l.b16 %v140
    %v189 = vunpack.c.l.b16 %v141
    %v190 = vunpack.c.l.b16 %v142
    %v191 = vunpack.c.l.b16 %v143
    %v192 = vunpack.c.l.b16 %v144
    %v193 = vunpack.c.l.b16 %v145
    %v194 = vunpack.c.l.b16 %v146
    %v195 = vunpack.c.l.b16 %v147
    %v196 = vunpack.c.l.b16 %v148
    %v197 = vunpack.c.l.b16 %v149
    %v198 = vunpack.c.l.b16 %v150
    %v199 = vunpack.c.l.b16 %v151
    %v200 = vunpack.c.l.b16 %v152
    %v201 = vunpack.c.l.b16 %v153
    %v202 = vunpack.c.l.b16 %v154
    %v203 = vpack.c.b16 %v180, %v179
    %v204 = vpack.c.b16 %v182, %v181
    %v205 = vpack.c.b16 %v184, %v183
    %v206 = vpack.c.b16 %v186, %v185
    %v207 = vpack.c.b16 %v188, %v187
    %v208 = vpack.c.b16 %v190, %v189
    %v209 = vpack.c.b16 %v192, %v191
    %v210 = vpack.c.b16 %v194, %v193
    %v211 = vpack.c.b16 %v196, %v195
    %v212 = vpack.c.b16 %v198, %v197
    %v213 = vpack.c.b16 %v200, %v199
    %v214 = vpack.c.b16 %v202, %v201
    %vm227 = vcmask 523264
    %v229 = vsel %vm227, %v130, 0
    %231 = vmatprep.subr.bf16.mxu0 0
    %232 = vmatpush1.bf16.msra.mxu0 %v203
    %233 = vmatprep.subr.bf16.mxu0 0
    %234 = vmatpush1.bf16.msra.mxu0 %v204
    %235 = vmatprep.subr.bf16.mxu0 0
    %236 = vmatpush1.bf16.msra.mxu0 %v205
    %237 = vmatprep.subr.bf16.mxu0 0
    %238 = vmatpush1.bf16.msra.mxu0 %v206
    %239 = vmatprep.subr.bf16.mxu0 0
    %240 = vmatpush1.bf16.msra.mxu0 %v207
    %241 = vmatprep.subr.bf16.mxu0 0
    %242 = vmatpush1.bf16.msra.mxu0 %v208
    %243 = vmatprep.subr.bf16.mxu0 0
    %244 = vmatpush1.bf16.msra.mxu0 %v209
    %245 = vmatprep.subr.bf16.mxu0 0
    %246 = vmatpush1.bf16.msra.mxu0 %v210
    %247 = vmatprep.subr.bf16.mxu0 0
    %248 = vmatpush1.bf16.msra.mxu0 %v211
    %249 = vmatprep.subr.bf16.mxu0 0
    %250 = vmatpush1.bf16.msra.mxu0 %v212
    %251 = vmatprep.subr.bf16.mxu0 0
    %252 = vmatpush1.bf16.msra.mxu0 %v213
    %253 = vmatprep.subr.bf16.mxu0 0
    %254 = vmatpush1.bf16.msra.mxu0 %v214
    %255 = vmatprep.subr.bf16.mxu0 0
    %256 = vmatpush1.bf16.msra.mxu0 0
    %257 = vmatprep.subr.bf16.mxu0 0
    %258 = vmatpush1.bf16.msra.mxu0 0
    %259 = vmatprep.subr.bf16.mxu0 0
    %260 = vmatpush1.bf16.msra.mxu0 0
    %261 = vmatprep.subr.bf16.mxu0 0
    %262 = vmatpush1.bf16.msra.mxu0 0
    %263 = vmatprep.mubr.bf16.mxu0 %v229
    %264 = vmatmul.mubr.bf16.gmra.mrb[0].mxu0 %v129
    %v265 = vpop.f32.mrb[0].mxu0
    %v266 = vadd.f32 0.0, %v265
    %v267 = vpop.f32.mrb[0].mxu0
    %v268 = vpop.f32.mrb[0].mxu0
    %v269 = vpop.f32.mrb[0].mxu0
    %270 = vdwg.mxu0
    %v271 = vpack.c.bf16 %v266, %v266
    %272 = vst [vmem:[#allocation7] sm:$0xf] %v271
    // Predicated region
    $region18: #{tpu_custom_call.1} parent=1 // pred_check
      _
    $region19: #{tpu_custom_call.1} parent=1 // pred_check_branch
      %274 = sbr.rel (0) target = $region21
    $region20: #{tpu_custom_call.1} parent=1 // pred_region
      %s276 = ssub.s32 64, 64
      %277 = vsyncadd [#allocation4], %s276
      %s279 = sshll.u32 [#allocation7], 4
      %s280 = int_to_ptr.vmem [resolvable:$true] %s279
      %282 = dma.vmem_to_hbm [thread:$0]  %s280, 64, %s2, [#allocation4]
    $region21: #{tpu_custom_call.1} parent=1 // pred_fallthru
      _
    // Predicated region
    $region22: #{tpu_custom_call.1} parent=1 // pred_check
      _
    $region23: #{tpu_custom_call.1} parent=1 // pred_check_branch
      %284 = sbr.rel (0) target = $region25
    $region24: #{tpu_custom_call.1} parent=1 // pred_region
      %285 = dma.done [#allocation4], 64
    $region25: #{tpu_custom_call.1} parent=1 // pred_fallthru
      _
    %286 = vsyncpa [#allocation3], 1
    %287 = vsyncpa [#allocation6], 1
    %288 = vsyncpa [#allocation4], 1

</llo_original>
